<compile_context>
chip_gen: v7x
topology: tpu7x:2x2x1
jax: 0.10.0
libtpu: 0.0.40
codegen_flags: <defaults>
</compile_context>

<pallas_src>
import jax
import jax.numpy as jnp
from jax.experimental import pallas as pl
from jax.experimental.pallas import tpu as pltpu

AP = 128  # in-kernel (lane-dense) padded logit width; never written to HBM


def _round8(n):
    return ((n + 7) // 8) * 8


def actor_kernel(x_ref, w1_ref, b1_ref, w2_ref, b2_ref, o_ref):
    # x_ref:  (tb, nS)                w1_ref: (nS, Hp)   b1_ref: (1, Hp)  [f32]
    # w2_ref: (Hp, AP)                b2_ref: (1, AP)    [f32, -1e30 in padded cols]
    # o_ref:  (tb, A) f32  -- only the real action columns go to HBM
    A = o_ref.shape[-1]

    # fc1 + tanh: cast x in-register to the weight dtype (no-op for f32 path),
    # MXU matmul with f32 accumulation, bias add + tanh in f32.
    xv = x_ref[...].astype(w1_ref.dtype)
    h = jnp.tanh(
        jnp.dot(xv, w1_ref[...], preferred_element_type=jnp.float32) + b1_ref[...]
    )

    # fc2: padded columns of w2 are zero and their bias is -1e30, so they behave
    # like -inf logits (exp underflows to exactly 0) without in-kernel masking.
    logits = (
        jnp.dot(h.astype(w2_ref.dtype), w2_ref[...],
                preferred_element_type=jnp.float32)
        + b2_ref[...]
    )

    # numerically-stable log_softmax over the padded last axis (== over real axis)
    m = jnp.max(logits, axis=-1, keepdims=True)
    shifted = logits - m
    lse = jnp.log(jnp.sum(jnp.exp(shifted), axis=-1, keepdims=True))

    # store only the real A columns
    o_ref[...] = (shifted[:, :A] - lse).astype(o_ref.dtype)


def prepare_actor_params(w1, b1, w2, b2, *, compute_dtype=jnp.float32):
    """One-time weight preparation (padding + dtype cast). Do NOT call per step.

    w1: (nS, H), b1: (H,), w2: (H, A), b2: (A,).
    compute_dtype: jnp.float32 (bit-tight) or jnp.bfloat16 (half the W/x MXU-input
    width; f32 accumulation and f32 biases keep numerics safe on all generations).
    """
    nS, H = w1.shape
    A = w2.shape[1]
    Hp = max(64, _round8(H))  # sublane-friendly hidden width; no further MXU-fill padding
    NEG = jnp.float32(-1e30)

    w1p = jnp.zeros((nS, Hp), jnp.float32).at[:, :H].set(jnp.asarray(w1, jnp.float32))
    b1p = jnp.zeros((1, Hp), jnp.float32).at[:, :H].set(
        jnp.asarray(b1, jnp.float32).reshape(1, H))
    w2p = jnp.zeros((Hp, AP), jnp.float32).at[:H, :A].set(jnp.asarray(w2, jnp.float32))
    # padded logit columns get a huge-negative bias (kept in f32)
    b2p = jnp.full((1, AP), NEG, jnp.float32).at[:, :A].set(
        jnp.asarray(b2, jnp.float32).reshape(1, A))

    w1p = w1p.astype(compute_dtype)
    w2p = w2p.astype(compute_dtype)
    return (w1p, b1p, w2p, b2p, A)


def actor_forward(x, params, *, max_tb=2048):
    """Forward pass of Actor.  x: (B, nS) (any float dtype; cast happens in-kernel)."""
    w1p, b1p, w2p, b2p, A = params
    B, nS = x.shape
    Hp = w1p.shape[1]

    # Batch tile: multiple of 8, capped at max_tb, and sized so mid/large batches
    # give >= 2 parallel grid steps (both v7x TensorCores busy).
    tb = max(8, min(max_tb, _round8(pl.cdiv(B, 2))))
    grid = (pl.cdiv(B, tb),)  # ragged last block handled by Pallas (row-wise ops only)

    return pl.pallas_call(
        actor_kernel,
        out_shape=jax.ShapeDtypeStruct((B, A), jnp.float32),
        grid_spec=pl.GridSpec(
            grid=grid,
            in_specs=[
                pl.BlockSpec((tb, nS), lambda i: (i, 0)),   # x tile over batch
                pl.BlockSpec((nS, Hp), lambda i: (0, 0)),   # W1 (resident)
                pl.BlockSpec((1, Hp), lambda i: (0, 0)),    # b1 (f32)
                pl.BlockSpec((Hp, AP), lambda i: (0, 0)),   # W2 (padded, resident)
                pl.BlockSpec((1, AP), lambda i: (0, 0)),    # b2 (f32, -1e30 pad)
            ],
            out_specs=pl.BlockSpec((tb, A), lambda i: (i, 0)),  # narrow A-col output
        ),
        compiler_params=pltpu.CompilerParams(
            dimension_semantics=("parallel",)
        ),
    )(x, w1p, b1p, w2p, b2p)


def reference_forward(x, w1, b1, w2, b2):
    h = jnp.tanh(x @ w1 + b1.reshape(1, -1))
    logits = h @ w2 + b2.reshape(1, -1)
    return jax.nn.log_softmax(logits, axis=-1)


if __name__ == "__main__":
    key = jax.random.PRNGKey(0)
    k_x, k_w1, k_b1, k_w2, k_b2, k_x2 = jax.random.split(key, 6)

    B, nS, H, A = 8, 32, 50, 4  # small shapes consistent with Actor(nS)

    x = jax.random.normal(k_x, (B, nS), dtype=jnp.float32)

    # Deterministic PyTorch-Linear-style init: U(-1/sqrt(fan_in), 1/sqrt(fan_in))
    lim1 = 1.0 / jnp.sqrt(jnp.float32(nS))
    lim2 = 1.0 / jnp.sqrt(jnp.float32(H))
    w1 = jax.random.uniform(k_w1, (nS, H), jnp.float32, -lim1, lim1)
    b1 = jax.random.uniform(k_b1, (H,), jnp.float32, -lim1, lim1)
    w2 = jax.random.uniform(k_w2, (H, A), jnp.float32, -lim2, lim2)
    b2 = jax.random.uniform(k_b2, (A,), jnp.float32, -lim2, lim2)

    ref = reference_forward(x, w1, b1, w2, b2)

    # 1) f32 path (one-time prepare, per-call is just the pallas_call)
    params_f32 = jax.tree.map(jax.block_until_ready,
                              prepare_actor_params(w1, b1, w2, b2))
    out = jax.block_until_ready(actor_forward(x, params_f32))
    assert out.shape == (B, A)
    assert jnp.allclose(out, ref, atol=1e-5, rtol=1e-5)

    # 2) non-multiple-of-8 batch (exercises the ragged last block path)
    B2 = 100
    x2 = jax.random.normal(k_x2, (B2, nS), dtype=jnp.float32)
    out2 = jax.block_until_ready(actor_forward(x2, params_f32))
    ref2 = reference_forward(x2, w1, b1, w2, b2)
    assert out2.shape == (B2, A)
    assert jnp.allclose(out2, ref2, atol=1e-5, rtol=1e-5)

    # 3) bf16 weight path (x stays f32, cast in-register; f32 accumulation),
    #    loose tolerance vs. the f32 reference.  Valid on v5e/v6e/v7x.
    params_bf16 = prepare_actor_params(w1, b1, w2, b2, compute_dtype=jnp.bfloat16)
    out_bf16 = jax.block_until_ready(actor_forward(x, params_bf16))
    assert jnp.allclose(out_bf16, ref, atol=5e-2, rtol=5e-2)

    print("KERNEL_OK")
</pallas_src>

<mosaic_0001>
module attributes {stable_mosaic.version = 11 : i64} {
  func.func @actor_kernel(%arg0: i32, %arg1: memref<8x32xf32, #tpu.memory_space<vmem>>, %arg2: memref<32x64xf32, #tpu.memory_space<vmem>>, %arg3: memref<1x64xf32, #tpu.memory_space<vmem>>, %arg4: memref<64x128xf32, #tpu.memory_space<vmem>>, %arg5: memref<1x128xf32, #tpu.memory_space<vmem>>, %arg6: memref<8x4xf32, #tpu.memory_space<vmem>>) attributes {dimension_semantics = [#tpu.dimension_semantics<parallel>], iteration_bounds = array<i64: 1>, scalar_prefetch = 0 : i64, scratch_operands = 0 : i64, tpu.core_type = #tpu.core_type<tc>, window_params = [{transform_indices = @transform_0, window_bounds = array<i64: 8, 32>}, {pipeline_mode = #tpu.pipeline_mode<synchronous>, transform_indices = @transform_1, window_bounds = array<i64: 32, 64>}, {pipeline_mode = #tpu.pipeline_mode<synchronous>, transform_indices = @transform_2, window_bounds = array<i64: 1, 64>}, {pipeline_mode = #tpu.pipeline_mode<synchronous>, transform_indices = @transform_3, window_bounds = array<i64: 64, 128>}, {pipeline_mode = #tpu.pipeline_mode<synchronous>, transform_indices = @transform_4, window_bounds = array<i64: 1, 128>}, {transform_indices = @transform_5, window_bounds = array<i64: 8, 4>}]} {
    %c0 = arith.constant 0 : index
    %c0_0 = arith.constant 0 : index
    %0 = vector.load %arg1[%c0, %c0_0] : memref<8x32xf32, #tpu.memory_space<vmem>>, vector<8x32xf32>
    %c0_1 = arith.constant 0 : index
    %c0_2 = arith.constant 0 : index
    %1 = vector.load %arg2[%c0_1, %c0_2] : memref<32x64xf32, #tpu.memory_space<vmem>>, vector<32x64xf32>
    %cst = arith.constant dense<0.000000e+00> : vector<8x64xf32>
    %2 = tpu.matmul %0, %1, %cst {dimension_numbers = #tpu.dot_dimension_numbers<[1], [0], [0], [1], [0, 0, 1, 1], [], []>} : vector<8x32xf32>, vector<32x64xf32>, vector<8x64xf32> -> vector<8x64xf32>
    %c0_3 = arith.constant 0 : index
    %c0_4 = arith.constant 0 : index
    %3 = vector.load %arg3[%c0_3, %c0_4] : memref<1x64xf32, #tpu.memory_space<vmem>>, vector<1x64xf32>
    %4 = vector.broadcast %3 : vector<1x64xf32> to vector<8x64xf32>
    %5 = arith.addf %2, %4 : vector<8x64xf32>
    %6 = math.tanh %5 : vector<8x64xf32>
    %c0_5 = arith.constant 0 : index
    %c0_6 = arith.constant 0 : index
    %7 = vector.load %arg4[%c0_5, %c0_6] : memref<64x128xf32, #tpu.memory_space<vmem>>, vector<64x128xf32>
    %cst_7 = arith.constant dense<0.000000e+00> : vector<8x128xf32>
    %8 = tpu.matmul %6, %7, %cst_7 {dimension_numbers = #tpu.dot_dimension_numbers<[1], [0], [0], [1], [0, 0, 1, 1], [], []>} : vector<8x64xf32>, vector<64x128xf32>, vector<8x128xf32> -> vector<8x128xf32>
    %c0_8 = arith.constant 0 : index
    %c0_9 = arith.constant 0 : index
    %9 = vector.load %arg5[%c0_8, %c0_9] : memref<1x128xf32, #tpu.memory_space<vmem>>, vector<1x128xf32>
    %10 = vector.broadcast %9 : vector<1x128xf32> to vector<8x128xf32>
    %11 = arith.addf %8, %10 : vector<8x128xf32>
    %cst_10 = arith.constant dense<0xFF800000> : vector<8xf32>
    %12 = vector.multi_reduction <maximumf>, %11, %cst_10 [1] : vector<8x128xf32> to vector<8xf32>
    %13 = vector.shape_cast %12 : vector<8xf32> to vector<8x1xf32>
    %14 = vector.broadcast %13 : vector<8x1xf32> to vector<8x128xf32>
    %15 = arith.subf %11, %14 : vector<8x128xf32>
    %16 = math.exp %15 : vector<8x128xf32>
    %cst_11 = arith.constant dense<0.000000e+00> : vector<8xf32>
    %17 = vector.multi_reduction <add>, %16, %cst_11 [1] : vector<8x128xf32> to vector<8xf32>
    %18 = vector.shape_cast %17 : vector<8xf32> to vector<8x1xf32>
    %19 = math.log %18 : vector<8x1xf32>
    %20 = vector.extract_strided_slice %15 {offsets = [0, 0], sizes = [8, 4], strides = [1, 1]} : vector<8x128xf32> to vector<8x4xf32>
    %21 = vector.broadcast %19 : vector<8x1xf32> to vector<8x4xf32>
    %22 = arith.subf %20, %21 : vector<8x4xf32>
    %c0_12 = arith.constant 0 : index
    %c0_13 = arith.constant 0 : index
    %23 = vector.load %arg6[%c0_12, %c0_13] : memref<8x4xf32, #tpu.memory_space<vmem>>, vector<8x4xf32>
    tpu.vector_store %arg6[%c0_12, %c0_13], %22 {strides = array<i32>} : memref<8x4xf32, #tpu.memory_space<vmem>>, vector<8x4xf32>,
    return
  }
  func.func @transform_0(%arg0: i32) -> (i32, i32) {
    %c0_i32 = arith.constant 0 : i32
    %c0_i32_0 = arith.constant 0 : i32
    return %arg0, %c0_i32 : i32, i32
  }
  func.func @transform_1(%arg0: i32) -> (i32, i32) {
    %c0_i32 = arith.constant 0 : i32
    %c0_i32_0 = arith.constant 0 : i32
    %c0_i32_1 = arith.constant 0 : i32
    return %c0_i32, %c0_i32_0 : i32, i32
  }
  func.func @transform_2(%arg0: i32) -> (i32, i32) {
    %c0_i32 = arith.constant 0 : i32
    %c0_i32_0 = arith.constant 0 : i32
    %c0_i32_1 = arith.constant 0 : i32
    return %c0_i32, %c0_i32_0 : i32, i32
  }
  func.func @transform_3(%arg0: i32) -> (i32, i32) {
    %c0_i32 = arith.constant 0 : i32
    %c0_i32_0 = arith.constant 0 : i32
    %c0_i32_1 = arith.constant 0 : i32
    return %c0_i32, %c0_i32_0 : i32, i32
  }
  func.func @transform_4(%arg0: i32) -> (i32, i32) {
    %c0_i32 = arith.constant 0 : i32
    %c0_i32_0 = arith.constant 0 : i32
    %c0_i32_1 = arith.constant 0 : i32
    return %c0_i32, %c0_i32_0 : i32, i32
  }
  func.func @transform_5(%arg0: i32) -> (i32, i32) {
    %c0_i32 = arith.constant 0 : i32
    %c0_i32_0 = arith.constant 0 : i32
    return %arg0, %c0_i32 : i32, i32
  }
}

</mosaic_0001>

<llo_original>
// kernel: tpu_custom_call.1
$region0: #{tpu_custom_call.1}
  #allocation0 [shape = 'u32[]', space=smem, size = 0x4, offset = 0x4, fixed_abs, tag = 'smem constant byte address 0x4 - core index']
  #allocation1 [shape = 'u32[144,128]{1,0:T(1,128)}', space=vmem, size = 0x12000, scoped, tag = 'internal scratch']
  %s0 = inlined_call_operand.hbm [shape: f32[8,32], index: 0, kind: input, shape index: {}]
  %s1 = inlined_call_operand.hbm [shape: f32[32,64], index: 1, kind: input, shape index: {}]
  %s2 = inlined_call_operand.vmem [shape: f32[1,64], index: 2, kind: input, shape index: {}]
  %s3 = inlined_call_operand.hbm [shape: f32[64,128], index: 3, kind: input, shape index: {}]
  %s4 = inlined_call_operand.vmem [shape: f32[1,128], index: 4, kind: input, shape index: {}]
  %s5 = inlined_call_operand.vmem [shape: f32[8,4], index: 5, kind: output, shape index: {}]
  %s6 = sld [smem:[#allocation0]]
  $region42: #{tpu_custom_call.1} parent=0
    _
  %s8 = ssub.s32 1, %s6
  %s9 = scalar_select 0, %s8, %s6
  $region1: #{tpu_custom_call.1} parent=0
    #allocation2 [shape = 'u8[4096]{0}', space=vmem, size = 0x1000, scoped, tag = 'input window, operand 0, single buffered']
    #allocation3 [shape = 's32[1]{0}', space=sflag, size = 0x4, scoped, tag = 'scoped memory for tpu_custom_call.1']
    #allocation4 [shape = 'u8[16384]{0}', space=vmem, size = 0x4000, scoped, tag = 'input window, operand 1, single buffered']
    #allocation5 [shape = 's32[1]{0}', space=sflag, size = 0x4, scoped, tag = 'scoped memory for tpu_custom_call.1']
    #allocation6 [shape = 'u8[32768]{0}', space=vmem, size = 0x8000, scoped, tag = 'input window, operand 3, single buffered']
    %10 = vsyncpa [#allocation3], 0
    %11 = vsyncpa [#allocation5], 0
    // Predicated region
    $region2: #{tpu_custom_call.1} parent=1 // pred_check
      _
    $region3: #{tpu_custom_call.1} parent=1 // pred_check_branch
      %13 = sbr.rel (0) target = $region5
    $region4: #{tpu_custom_call.1} parent=1 // pred_region
      %s15 = ssub.s32 128, 128
      %16 = vsyncadd [#allocation3], %s15
      %s18 = sshll.u32 [#allocation2], 4
      %s19 = int_to_ptr.vmem [resolvable:$true] %s18
      %21 = dma.hbm_to_vmem [thread:$0]  %s0, 128, %s19, [#allocation3]
    $region5: #{tpu_custom_call.1} parent=1 // pred_fallthru
      _
    // Predicated region
    $region6: #{tpu_custom_call.1} parent=1 // pred_check
      _
    $region7: #{tpu_custom_call.1} parent=1 // pred_check_branch
      %23 = sbr.rel (0) target = $region9
    $region8: #{tpu_custom_call.1} parent=1 // pred_region
      %s25 = ssub.s32 512, 512
      %26 = vsyncadd [#allocation5], %s25
      %s27 = sshll.u32 [#allocation4], 4
      %s28 = int_to_ptr.vmem [resolvable:$true] %s27
      %33 = dma.hbm_to_vmem [thread:$0]  %s1, 512, %s28, [#allocation5], 128, 128, 8
    $region9: #{tpu_custom_call.1} parent=1 // pred_fallthru
      _
    // Predicated region
    $region10: #{tpu_custom_call.1} parent=1 // pred_check
      _
    $region11: #{tpu_custom_call.1} parent=1 // pred_check_branch
      %35 = sbr.rel (0) target = $region13
    $region12: #{tpu_custom_call.1} parent=1 // pred_region
      _
    $region13: #{tpu_custom_call.1} parent=1 // pred_fallthru
      _
    // Predicated region
    $region14: #{tpu_custom_call.1} parent=1 // pred_check
      _
    $region15: #{tpu_custom_call.1} parent=1 // pred_check_branch
      %37 = sbr.rel (0) target = $region17
    $region16: #{tpu_custom_call.1} parent=1 // pred_region
      %s39 = ssub.s32 1024, 1024
      %40 = vsyncadd [#allocation5], %s39
      %s41 = sshll.u32 [#allocation6], 4
      %s42 = int_to_ptr.vmem [resolvable:$true] %s41
      %47 = dma.hbm_to_vmem [thread:$0]  %s3, 1024, %s42, [#allocation5], 128, 128, 8
    $region17: #{tpu_custom_call.1} parent=1 // pred_fallthru
      _
    // Predicated region
    $region18: #{tpu_custom_call.1} parent=1 // pred_check
      _
    $region19: #{tpu_custom_call.1} parent=1 // pred_check_branch
      %49 = sbr.rel (0) target = $region21
    $region20: #{tpu_custom_call.1} parent=1 // pred_region
      _
    $region21: #{tpu_custom_call.1} parent=1 // pred_fallthru
      _
    // Predicated region
    $region22: #{tpu_custom_call.1} parent=1 // pred_check
      _
    $region23: #{tpu_custom_call.1} parent=1 // pred_check_branch
      %51 = sbr.rel (0) target = $region25
    $region24: #{tpu_custom_call.1} parent=1 // pred_region
      %52 = dma.done [#allocation3], 128
    $region25: #{tpu_custom_call.1} parent=1 // pred_fallthru
      _
    // Predicated region
    $region26: #{tpu_custom_call.1} parent=1 // pred_check
      _
    $region27: #{tpu_custom_call.1} parent=1 // pred_check_branch
      %54 = sbr.rel (0) target = $region29
    $region28: #{tpu_custom_call.1} parent=1 // pred_region
      %55 = dma.done [#allocation5], 512
    $region29: #{tpu_custom_call.1} parent=1 // pred_fallthru
      _
    // Predicated region
    $region30: #{tpu_custom_call.1} parent=1 // pred_check
      _
    $region31: #{tpu_custom_call.1} parent=1 // pred_check_branch
      %57 = sbr.rel (0) target = $region33
    $region32: #{tpu_custom_call.1} parent=1 // pred_region
      %58 = dma.done [#allocation5], 1024
    $region33: #{tpu_custom_call.1} parent=1 // pred_fallthru
      _
    %v59 = vld [vmem:[#allocation2] sm:$0xff]
    %v60 = vld [vmem:[#allocation4] sm:$0xff]
    %v61 = vld [vmem:[#allocation4 + $0x8] sm:$0xff]
    %v62 = vld [vmem:[#allocation4 + $0x10] sm:$0xff]
    %v63 = vld [vmem:[#allocation4 + $0x18] sm:$0xff]
    %v64 = vld [vmem:[%s2] sm:$0x1]
    %v66 = vlaneseq
    %v67 = vshrl.u32 %v66, 7
    %v68 = vsub.s32 0, %v67
    %v69 = vrot.slane %v64, %v68
    %vm71 = vcmask 261120
    %v73 = vsel %vm71, %v59, 0
    %75 = vmatprep.subr.mxu0 0.0
    %76 = vmatpush1.msra.mxu0 %v60
    %77 = vmatprep.subr.mxu0 0.0
    %78 = vmatpush1.msra.mxu0 %v61
    %79 = vmatprep.subr.mxu0 0.0
    %80 = vmatpush1.msra.mxu0 %v62
    %81 = vmatprep.subr.mxu0 0.0
    %82 = vmatpush1.msra.mxu0 %v63
    %83 = vmatprep.subr.mxu0 0.0
    %84 = vmatpush1.msra.mxu0 0.0
    %85 = vmatprep.subr.mxu0 0.0
    %86 = vmatpush1.msra.mxu0 0.0
    %87 = vmatprep.subr.mxu0 0.0
    %88 = vmatpush1.msra.mxu0 0.0
    %89 = vmatprep.subr.mxu0 0.0
    %90 = vmatpush1.msra.mxu0 0.0
    %91 = vmatprep.subr.mxu0 0.0
    %92 = vmatpush1.msra.mxu0 0.0
    %93 = vmatprep.subr.mxu0 0.0
    %94 = vmatpush1.msra.mxu0 0.0
    %95 = vmatprep.subr.mxu0 0.0
    %96 = vmatpush1.msra.mxu0 0.0
    %97 = vmatprep.subr.mxu0 0.0
    %98 = vmatpush1.msra.mxu0 0.0
    %99 = vmatprep.subr.mxu0 0.0
    %100 = vmatpush1.msra.mxu0 0.0
    %101 = vmatprep.subr.mxu0 0.0
    %102 = vmatpush1.msra.mxu0 0.0
    %103 = vmatprep.subr.mxu0 0.0
    %104 = vmatpush1.msra.mxu0 0.0
    %105 = vmatprep.subr.mxu0 0.0
    %106 = vmatpush1.msra.mxu0 0.0
    %107 = vmatprep.subr.mxu0 0.0
    %108 = vmatpush1.msra.mxu0 0.0
    %109 = vmatprep.subr.mxu0 0.0
    %110 = vmatpush1.msra.mxu0 0.0
    %111 = vmatprep.subr.mxu0 0.0
    %112 = vmatpush1.msra.mxu0 0.0
    %113 = vmatprep.subr.mxu0 0.0
    %114 = vmatpush1.msra.mxu0 0.0
    %115 = vmatprep.subr.mxu0 0.0
    %116 = vmatpush1.msra.mxu0 0.0
    %117 = vmatprep.subr.mxu0 0.0
    %118 = vmatpush1.msra.mxu0 0.0
    %119 = vmatprep.subr.mxu0 0.0
    %120 = vmatpush1.msra.mxu0 0.0
    %121 = vmatprep.subr.mxu0 0.0
    %122 = vmatpush1.msra.mxu0 0.0
    %123 = vmatprep.subr.mxu0 0.0
    %124 = vmatpush1.msra.mxu0 0.0
    %125 = vmatprep.subr.mxu0 0.0
    %126 = vmatpush1.msra.mxu0 0.0
    %127 = vmatprep.subr.mxu0 0.0
    %128 = vmatpush1.msra.mxu0 0.0
    %129 = vmatprep.subr.mxu0 0.0
    %130 = vmatpush1.msra.mxu0 0.0
    %131 = vmatprep.subr.mxu0 0.0
    %132 = vmatpush1.msra.mxu0 0.0
    %133 = vmatprep.subr.mxu0 0.0
    %134 = vmatpush1.msra.mxu0 0.0
    %135 = vmatprep.subr.mxu0 0.0
    %136 = vmatpush1.msra.mxu0 0.0
    %137 = vmatprep.subr.mxu0 0.0
    %138 = vmatpush1.msra.mxu0 0.0
    %139 = vmatprep.mubr.f32.mxu0 0.0
    %140 = vmatmul.mubr.f32.gmra.mrb[0].mxu0 %v73
    %v141 = vpop.f32.mrb[0].mxu0
    %v142 = vadd.f32 %v69, %v141
    %v143 = vpop.f32.mrb[0].mxu0
    %144 = vdwg.mxu0
    %v145 = vtanh.pop %v142
    %v146 = vld [vmem:[#allocation6] sm:$0xff]
    %v147 = vld [vmem:[#allocation6 + $0x8] sm:$0xff]
    %v148 = vld [vmem:[#allocation6 + $0x10] sm:$0xff]
    %v149 = vld [vmem:[#allocation6 + $0x18] sm:$0xff]
    %v150 = vld [vmem:[#allocation6 + $0x20] sm:$0xff]
    %v151 = vld [vmem:[#allocation6 + $0x28] sm:$0xff]
    %v152 = vld [vmem:[#allocation6 + $0x30] sm:$0xff]
    %v153 = vld [vmem:[#allocation6 + $0x38] sm:$0xff]
    %v154 = vld [vmem:[%s4] sm:$0x1]
    %v156 = vlaneseq
    %v157 = vshrl.u32 %v156, 7
    %v158 = vsub.s32 0, %v157
    %v159 = vrot.slane %v154, %v158
    %vm161 = vcmask 523264
    %v163 = vsel %vm161, %v145, 0
    %165 = vmatprep.subr.mxu0 0.0
    %166 = vmatpush1.msra.mxu0 %v146
    %167 = vmatprep.subr.mxu0 0.0
    %168 = vmatpush1.msra.mxu0 %v147
    %169 = vmatprep.subr.mxu0 0.0
    %170 = vmatpush1.msra.mxu0 %v148
    %171 = vmatprep.subr.mxu0 0.0
    %172 = vmatpush1.msra.mxu0 %v149
    %173 = vmatprep.subr.mxu0 0.0
    %174 = vmatpush1.msra.mxu0 %v150
    %175 = vmatprep.subr.mxu0 0.0
    %176 = vmatpush1.msra.mxu0 %v151
    %177 = vmatprep.subr.mxu0 0.0
    %178 = vmatpush1.msra.mxu0 %v152
    %179 = vmatprep.subr.mxu0 0.0
    %180 = vmatpush1.msra.mxu0 %v153
    %181 = vmatprep.subr.mxu0 0.0
    %182 = vmatpush1.msra.mxu0 0.0
    %183 = vmatprep.subr.mxu0 0.0
    %184 = vmatpush1.msra.mxu0 0.0
    %185 = vmatprep.subr.mxu0 0.0
    %186 = vmatpush1.msra.mxu0 0.0
    %187 = vmatprep.subr.mxu0 0.0
    %188 = vmatpush1.msra.mxu0 0.0
    %189 = vmatprep.subr.mxu0 0.0
    %190 = vmatpush1.msra.mxu0 0.0
    %191 = vmatprep.subr.mxu0 0.0
    %192 = vmatpush1.msra.mxu0 0.0
    %193 = vmatprep.subr.mxu0 0.0
    %194 = vmatpush1.msra.mxu0 0.0
    %195 = vmatprep.subr.mxu0 0.0
    %196 = vmatpush1.msra.mxu0 0.0
    %197 = vmatprep.subr.mxu0 0.0
    %198 = vmatpush1.msra.mxu0 0.0
    %199 = vmatprep.subr.mxu0 0.0
    %200 = vmatpush1.msra.mxu0 0.0
    %201 = vmatprep.subr.mxu0 0.0
    %202 = vmatpush1.msra.mxu0 0.0
    %203 = vmatprep.subr.mxu0 0.0
    %204 = vmatpush1.msra.mxu0 0.0
    %205 = vmatprep.subr.mxu0 0.0
    %206 = vmatpush1.msra.mxu0 0.0
    %207 = vmatprep.subr.mxu0 0.0
    %208 = vmatpush1.msra.mxu0 0.0
    %209 = vmatprep.subr.mxu0 0.0
    %210 = vmatpush1.msra.mxu0 0.0
    %211 = vmatprep.subr.mxu0 0.0
    %212 = vmatpush1.msra.mxu0 0.0
    %213 = vmatprep.subr.mxu0 0.0
    %214 = vmatpush1.msra.mxu0 0.0
    %215 = vmatprep.subr.mxu0 0.0
    %216 = vmatpush1.msra.mxu0 0.0
    %217 = vmatprep.subr.mxu0 0.0
    %218 = vmatpush1.msra.mxu0 0.0
    %219 = vmatprep.subr.mxu0 0.0
    %220 = vmatpush1.msra.mxu0 0.0
    %221 = vmatprep.subr.mxu0 0.0
    %222 = vmatpush1.msra.mxu0 0.0
    %223 = vmatprep.subr.mxu0 0.0
    %224 = vmatpush1.msra.mxu0 0.0
    %225 = vmatprep.subr.mxu0 0.0
    %226 = vmatpush1.msra.mxu0 0.0
    %227 = vmatprep.subr.mxu0 0.0
    %228 = vmatpush1.msra.mxu0 0.0
    %229 = vmatprep.mubr.f32.mxu0 0.0
    %230 = vmatmul.mubr.f32.gmra.mrb[0].mxu0 %v163
    %v231 = vpop.f32.mrb[0].mxu0
    %v232 = vadd.f32 %v159, %v231
    %v233 = vpop.f32.mrb[0].mxu0
    %234 = vdwg.mxu0
    %235 = vmax.xlane.f32.xlu0 %v232
    %v236 = vpop.xlane.xlu0 %235
    %v237 = vsub.f32 %v232, %v236
    %v238 = vmul.f32 %v237, 1.442695
    %v239 = vpow.pop %v238
    %240 = vadd.xlane.f32.xlu0 %v239
    %v241 = vpop.xlane.xlu0 %240
    %v242 = vlog2.pop %v241
    %v243 = vmul.f32 %v242, 0.6931472
    %v244 = vsub.f32 %v237, %v243
    %vm245 = vcmask 31744
    %246 = vst.msk [vmem:[%s5] sm:$0xff] %vm245, %v244
    // Predicated region
    $region34: #{tpu_custom_call.1} parent=1 // pred_check
      _
    $region35: #{tpu_custom_call.1} parent=1 // pred_check_branch
      %248 = sbr.rel (0) target = $region37
    $region36: #{tpu_custom_call.1} parent=1 // pred_region
      _
    $region37: #{tpu_custom_call.1} parent=1 // pred_fallthru
      _
    // Predicated region
    $region38: #{tpu_custom_call.1} parent=1 // pred_check
      _
    $region39: #{tpu_custom_call.1} parent=1 // pred_check_branch
      %250 = sbr.rel (0) target = $region41
    $region40: #{tpu_custom_call.1} parent=1 // pred_region
      _
    $region41: #{tpu_custom_call.1} parent=1 // pred_fallthru
      _
    %251 = vsyncpa [#allocation3], 1
    %252 = vsyncpa [#allocation5], 1

</llo_original>
